<compile_context>
chip_gen: v6e
topology: v6e:2x2x1
jax: 0.10.0
libtpu: 0.0.40
codegen_flags: <defaults>
</compile_context>

<pallas_src>
import functools

import numpy as np
import jax
import jax.numpy as jnp
from jax.experimental import pallas as pl
from jax.experimental.pallas import tpu as pltpu

_VIS_BIT = 30
_ID_MASK = (1 << _VIS_BIT) - 1


def _knn_sampler_kernel(packed_ref, idx_ref, out_ref, *, B, K, n_neg, R,
                        exclude_visited):
    """One grid step = B check-ins, B*n_neg negative samples."""
    BN = B * n_neg

    packed = packed_ref[...]                         # (B, K)  ids | vis<<30, lane-dense
    packed_t = jnp.transpose(packed)                 # (K, B)  single hoisted XLU transpose
    # Expand each check-in's neighbour column to its n_neg sample slots.
    # Lane order of a slot is s = b * n_neg + j.  Hoisted out of the retry loop.
    packed_exp = jnp.concatenate(
        [jnp.broadcast_to(packed_t[:, b:b + 1], (K, n_neg)) for b in range(B)],
        axis=1)                                      # (K, BN)
    sub_iota = jax.lax.broadcasted_iota(jnp.int32, (K, BN), 0)   # hoisted

    def draw(r):
        # Sampled neighbour index in [0, K) per (check-in, sample) slot, retry r.
        idx_row = idx_ref[0, pl.ds(r, 1), :]         # (1, BN) lane-major
        match = sub_iota == idx_row                  # (K, BN) one-hot along sublanes
        g = jnp.sum(jnp.where(match, packed_exp, 0), axis=0, keepdims=True)  # (1, BN)
        return g & _ID_MASK, (g >> _VIS_BIT) & 1     # sampled ids, visited flags

    chosen, chosen_vis = draw(0)
    if exclude_visited and R > 1:
        # TODO(synk): PyTorch resamples unboundedly; bounded to R retries here
        # (keeps the last draw if every retry hit a visited neighbour).
        def body(r, carry):
            cur, cur_vis = carry
            samp, visf = draw(r)
            still_bad = cur_vis > 0
            return (jnp.where(still_bad, samp, cur),
                    jnp.where(still_bad, visf, cur_vis))

        chosen, chosen_vis = jax.lax.fori_loop(1, R, body, (chosen, chosen_vis))

    out_ref[...] = chosen                            # (1, BN) lane-dense store


def knn_sampler_train_next(trg_seq, n_neg, user, *, neighbor_table, user_visited,
                           seed, exclude_visited=True, n_retries=8):
    """Pallas equivalent of KNNSamplerTrainNext.forward.

    trg_seq:        [S, 2] int32, column 1 holds the target location id.
    neighbor_table: [L, K] int32, K-nearest-neighbour ids per location.
    user_visited:   [U, L] bool, per-user visited-location mask.
    Returns:        [S, n_neg] int32 negative samples.
    """
    S = trg_seq.shape[0]
    L, K = neighbor_table.shape
    assert L < (1 << _VIS_BIT), "location ids must fit below the packed visited bit"
    n_neg = int(n_neg)

    # Batch size: B check-ins per grid step, chosen so B % 8 == 0 (sublane-dense
    # packed block) and B * n_neg is a multiple of 128 (lane-dense output row).
    bn_unit = int(np.lcm(n_neg, 128)) // n_neg
    B = int(-(-bn_unit // 8) * 8)
    BN = B * n_neg
    R = int(n_retries) if exclude_visited else 1
    S_pad = int(-(-S // B) * B)
    n_steps = S_pad // B

    # Parameter setup / pre-gather: O(S*K) HBM traffic instead of O(L*K).
    trg_locs = trg_seq[:, 1].astype(jnp.int32)                     # [S]
    ngb_rows = neighbor_table.astype(jnp.int32)[trg_locs]          # [S, K]
    visited_mask = user_visited[user].astype(jnp.int32)            # [L]
    vis_rows = visited_mask[ngb_rows]                              # [S, K]
    packed = ngb_rows | (vis_rows << _VIS_BIT)                     # [S, K]
    if S_pad > S:
        packed = jnp.pad(packed, ((0, S_pad - S), (0, 0)))         # pad rows (sliced later)

    # Uniform sample indices in [0, K), drawn outside the kernel (deterministic,
    # unbiased for arbitrary K; in-kernel hardware PRNG is unavailable in
    # interpret mode).  Kernel does the gather + rejection.
    key = jax.random.PRNGKey(int(seed))
    idx = jax.random.randint(key, (n_steps, R, BN), 0, K, dtype=jnp.int32)

    kernel = functools.partial(_knn_sampler_kernel, B=B, K=K, n_neg=n_neg, R=R,
                               exclude_visited=bool(exclude_visited))
    out = pl.pallas_call(
        kernel,
        out_shape=jax.ShapeDtypeStruct((n_steps, BN), jnp.int32),
        grid=(n_steps,),
        in_specs=[
            pl.BlockSpec((B, K), lambda i: (i, 0)),          # packed neighbour rows
            pl.BlockSpec((1, R, BN), lambda i: (i, 0, 0)),   # per-retry sample indices
        ],
        out_specs=pl.BlockSpec((1, BN), lambda i: (i, 0)),
        compiler_params=pltpu.CompilerParams(dimension_semantics=("parallel",)),
    )(packed, idx)

    return out.reshape(S_pad, n_neg)[:S]


if __name__ == "__main__":
    key = jax.random.PRNGKey(0)
    k1, k2, k3 = jax.random.split(key, 3)

    L = 256            # number of locations
    K = 128            # n_neighbor
    U = 4              # number of users
    S = 8              # trg_seq length
    n_neg = 16

    # Deterministic synthetic "loc_query_system": K neighbour ids per location.
    neighbor_table = jax.random.randint(k1, (L, K), 0, L, dtype=jnp.int32)
    # Deterministic synthetic "user_visited_locs": per-user visited mask.
    user_visited = jax.random.bernoulli(k2, 0.3, (U, L))
    # trg_seq: [S, 2] check-ins, column 1 is the target location id.
    trg_seq = jax.random.randint(k3, (S, 2), 0, L, dtype=jnp.int32)
    user = 1

    neg_samples = knn_sampler_train_next(
        trg_seq, n_neg, user,
        neighbor_table=neighbor_table,
        user_visited=user_visited,
        seed=1234,
        exclude_visited=True,
        n_retries=8,
    )
    neg_samples = jax.block_until_ready(neg_samples)

    # Light correctness check: every sample must come from the target's
    # neighbour list (exact np.random stream is not reproducible).
    out_np = np.asarray(neg_samples)
    tbl_np = np.asarray(neighbor_table)
    trg_np = np.asarray(trg_seq[:, 1])
    assert out_np.shape == (S, n_neg) and out_np.dtype == np.int32
    for i in range(S):
        assert np.all(np.isin(out_np[i], tbl_np[trg_np[i]])), f"row {i} not in neighbour list"

    print("KERNEL_OK")
</pallas_src>

<mosaic_0001>
module attributes {stable_mosaic.version = 11 : i64} {
  func.func @_knn_sampler_kernel(%arg0: i32, %arg1: memref<8x128xi32, #tpu.memory_space<vmem>>, %arg2: memref<1x8x128xi32, #tpu.memory_space<vmem>>, %arg3: memref<1x128xi32, #tpu.memory_space<vmem>>) attributes {dimension_semantics = [#tpu.dimension_semantics<parallel>], iteration_bounds = array<i64: 1>, scalar_prefetch = 0 : i64, scratch_operands = 0 : i64, tpu.core_type = #tpu.core_type<tc>, window_params = [{transform_indices = @transform_0, window_bounds = array<i64: 8, 128>}, {transform_indices = @transform_1, window_bounds = array<i64: 1, 8, 128>}, {transform_indices = @transform_2, window_bounds = array<i64: 1, 128>}]} {
    %c0 = arith.constant 0 : index
    %c0_0 = arith.constant 0 : index
    %0 = vector.load %arg1[%c0, %c0_0] : memref<8x128xi32, #tpu.memory_space<vmem>>, vector<8x128xi32>
    %1 = tpu.transpose %0, [1, 0] : vector<8x128xi32> -> vector<128x8xi32>
    %2 = vector.extract_strided_slice %1 {offsets = [0, 0], sizes = [128, 1], strides = [1, 1]} : vector<128x8xi32> to vector<128x1xi32>
    %3 = vector.shape_cast %2 : vector<128x1xi32> to vector<128x1xi32>
    %4 = vector.broadcast %3 : vector<128x1xi32> to vector<128x16xi32>
    %5 = vector.extract_strided_slice %1 {offsets = [0, 1], sizes = [128, 1], strides = [1, 1]} : vector<128x8xi32> to vector<128x1xi32>
    %6 = vector.shape_cast %5 : vector<128x1xi32> to vector<128x1xi32>
    %7 = vector.broadcast %6 : vector<128x1xi32> to vector<128x16xi32>
    %8 = vector.extract_strided_slice %1 {offsets = [0, 2], sizes = [128, 1], strides = [1, 1]} : vector<128x8xi32> to vector<128x1xi32>
    %9 = vector.shape_cast %8 : vector<128x1xi32> to vector<128x1xi32>
    %10 = vector.broadcast %9 : vector<128x1xi32> to vector<128x16xi32>
    %11 = vector.extract_strided_slice %1 {offsets = [0, 3], sizes = [128, 1], strides = [1, 1]} : vector<128x8xi32> to vector<128x1xi32>
    %12 = vector.shape_cast %11 : vector<128x1xi32> to vector<128x1xi32>
    %13 = vector.broadcast %12 : vector<128x1xi32> to vector<128x16xi32>
    %14 = vector.extract_strided_slice %1 {offsets = [0, 4], sizes = [128, 1], strides = [1, 1]} : vector<128x8xi32> to vector<128x1xi32>
    %15 = vector.shape_cast %14 : vector<128x1xi32> to vector<128x1xi32>
    %16 = vector.broadcast %15 : vector<128x1xi32> to vector<128x16xi32>
    %17 = vector.extract_strided_slice %1 {offsets = [0, 5], sizes = [128, 1], strides = [1, 1]} : vector<128x8xi32> to vector<128x1xi32>
    %18 = vector.shape_cast %17 : vector<128x1xi32> to vector<128x1xi32>
    %19 = vector.broadcast %18 : vector<128x1xi32> to vector<128x16xi32>
    %20 = vector.extract_strided_slice %1 {offsets = [0, 6], sizes = [128, 1], strides = [1, 1]} : vector<128x8xi32> to vector<128x1xi32>
    %21 = vector.shape_cast %20 : vector<128x1xi32> to vector<128x1xi32>
    %22 = vector.broadcast %21 : vector<128x1xi32> to vector<128x16xi32>
    %23 = vector.extract_strided_slice %1 {offsets = [0, 7], sizes = [128, 1], strides = [1, 1]} : vector<128x8xi32> to vector<128x1xi32>
    %24 = vector.shape_cast %23 : vector<128x1xi32> to vector<128x1xi32>
    %25 = vector.broadcast %24 : vector<128x1xi32> to vector<128x16xi32>
    %26 = tpu.concatenate %4, %7, %10, %13, %16, %19, %22, %25 in 1 : vector<128x16xi32>, vector<128x16xi32>, vector<128x16xi32>, vector<128x16xi32>, vector<128x16xi32>, vector<128x16xi32>, vector<128x16xi32>, vector<128x16xi32> -> vector<128x128xi32>
    %27 = tpu.iota {dimensions = array<i32: 0>} : vector<128x128xi32>
    %c0_1 = arith.constant 0 : index
    %c0_2 = arith.constant 0 : index
    %c0_3 = arith.constant 0 : index
    %28 = vector.load %arg2[%c0_1, %c0_2, %c0_3] : memref<1x8x128xi32, #tpu.memory_space<vmem>>, vector<1x1x128xi32>
    %29 = vector.shape_cast %28 : vector<1x1x128xi32> to vector<1x128xi32>
    %30 = vector.broadcast %29 : vector<1x128xi32> to vector<128x128xi32>
    %31 = arith.cmpi eq, %27, %30 : vector<128x128xi32>
    %c0_i32 = arith.constant 0 : i32
    %32 = vector.broadcast %c0_i32 : i32 to vector<128x128xi32>
    %33 = arith.select %31, %26, %32 : vector<128x128xi1>, vector<128x128xi32>
    %cst = arith.constant dense<0> : vector<128xi32>
    %34 = vector.multi_reduction <add>, %33, %cst [0] : vector<128x128xi32> to vector<128xi32>
    %35 = vector.shape_cast %34 : vector<128xi32> to vector<1x128xi32>
    %c1073741823_i32 = arith.constant 1073741823 : i32
    %36 = vector.broadcast %c1073741823_i32 : i32 to vector<1x128xi32>
    %37 = arith.andi %35, %36 : vector<1x128xi32>
    %c30_i32 = arith.constant 30 : i32
    %38 = vector.broadcast %c30_i32 : i32 to vector<1x128xi32>
    %39 = arith.shrsi %35, %38 : vector<1x128xi32>
    %c1_i32 = arith.constant 1 : i32
    %40 = vector.broadcast %c1_i32 : i32 to vector<1x128xi32>
    %41 = arith.andi %39, %40 : vector<1x128xi32>
    %c1_i32_4 = arith.constant 1 : i32
    %c7_i32 = arith.constant 7 : i32
    %42 = arith.addi %c1_i32_4, %c7_i32 : i32
    %c1_i32_5 = arith.constant 1 : i32
    %43:2 = scf.for %arg4 = %c1_i32_4 to %42 step %c1_i32_5 iter_args(%arg5 = %37, %arg6 = %41) -> (vector<1x128xi32>, vector<1x128xi32>)  : i32 {
      %c0_9 = arith.constant 0 : index
      %45 = arith.index_cast %arg4 : i32 to index
      %c0_10 = arith.constant 0 : index
      %46 = vector.load %arg2[%c0_9, %45, %c0_10] : memref<1x8x128xi32, #tpu.memory_space<vmem>>, vector<1x1x128xi32>
      %47 = vector.shape_cast %46 : vector<1x1x128xi32> to vector<1x128xi32>
      %48 = vector.broadcast %47 : vector<1x128xi32> to vector<128x128xi32>
      %49 = arith.cmpi eq, %27, %48 : vector<128x128xi32>
      %c0_i32_11 = arith.constant 0 : i32
      %50 = vector.broadcast %c0_i32_11 : i32 to vector<128x128xi32>
      %51 = arith.select %49, %26, %50 : vector<128x128xi1>, vector<128x128xi32>
      %cst_12 = arith.constant dense<0> : vector<128xi32>
      %52 = vector.multi_reduction <add>, %51, %cst_12 [0] : vector<128x128xi32> to vector<128xi32>
      %53 = vector.shape_cast %52 : vector<128xi32> to vector<1x128xi32>
      %c1073741823_i32_13 = arith.constant 1073741823 : i32
      %54 = vector.broadcast %c1073741823_i32_13 : i32 to vector<1x128xi32>
      %55 = arith.andi %53, %54 : vector<1x128xi32>
      %c30_i32_14 = arith.constant 30 : i32
      %56 = vector.broadcast %c30_i32_14 : i32 to vector<1x128xi32>
      %57 = arith.shrsi %53, %56 : vector<1x128xi32>
      %c1_i32_15 = arith.constant 1 : i32
      %58 = vector.broadcast %c1_i32_15 : i32 to vector<1x128xi32>
      %59 = arith.andi %57, %58 : vector<1x128xi32>
      %c0_i32_16 = arith.constant 0 : i32
      %60 = vector.broadcast %c0_i32_16 : i32 to vector<1x128xi32>
      %61 = arith.cmpi sgt, %arg6, %60 : vector<1x128xi32>
      %62 = arith.select %61, %55, %arg5 : vector<1x128xi1>, vector<1x128xi32>
      %63 = arith.select %61, %59, %arg6 : vector<1x128xi1>, vector<1x128xi32>
      scf.yield %62, %63 : vector<1x128xi32>, vector<1x128xi32>
    }
    %c7_i32_6 = arith.constant 7 : i32
    %c0_7 = arith.constant 0 : index
    %c0_8 = arith.constant 0 : index
    %44 = vector.load %arg3[%c0_7, %c0_8] : memref<1x128xi32, #tpu.memory_space<vmem>>, vector<1x128xi32>
    tpu.vector_store %arg3[%c0_7, %c0_8], %43#0 {strides = array<i32>} : memref<1x128xi32, #tpu.memory_space<vmem>>, vector<1x128xi32>,
    return
  }
  func.func @transform_0(%arg0: i32) -> (i32, i32) {
    %c0_i32 = arith.constant 0 : i32
    %c0_i32_0 = arith.constant 0 : i32
    return %arg0, %c0_i32 : i32, i32
  }
  func.func @transform_1(%arg0: i32) -> (i32, i32, i32) {
    %c0_i32 = arith.constant 0 : i32
    %c0_i32_0 = arith.constant 0 : i32
    %c0_i32_1 = arith.constant 0 : i32
    return %arg0, %c0_i32, %c0_i32_0 : i32, i32, i32
  }
  func.func @transform_2(%arg0: i32) -> (i32, i32) {
    %c0_i32 = arith.constant 0 : i32
    %c0_i32_0 = arith.constant 0 : i32
    return %arg0, %c0_i32 : i32, i32
  }
}

</mosaic_0001>

<llo_original>
// kernel: tpu_custom_call.1
$region0: #{tpu_custom_call.1}
  #allocation0 [shape = 'u32[]', space=smem, size = 0x4, offset = 0x4, fixed_abs, tag = 'smem constant byte address 0x4 - core index']
  #allocation1 [shape = 'u32[144,128]{1,0:T(1,128)}', space=vmem, size = 0x12000, scoped, tag = 'internal scratch']
  %s0 = inlined_call_operand.hbm [shape: s32[8,128], index: 0, kind: input, shape index: {}]
  %s1 = inlined_call_operand.hbm [shape: s32[1,8,128], index: 1, kind: input, shape index: {}]
  %s2 = inlined_call_operand.hbm [shape: s32[1,128], index: 2, kind: output, shape index: {}]
  %s3 = sld [smem:[#allocation0]]
  $region33: #{tpu_custom_call.1} parent=0
    _
  %s5 = ssub.s32 1, %s3
  %s6 = scalar_select 0, %s5, %s3
  $region1: #{tpu_custom_call.1} parent=0
    #allocation2 [shape = 'u8[4096]{0}', space=vmem, size = 0x1000, scoped, tag = 'input window, operand 0, single buffered']
    #allocation3 [shape = 's32[1]{0}', space=sflag, size = 0x4, scoped, tag = 'scoped memory for tpu_custom_call.1']
    #allocation4 [shape = 's32[1]{0}', space=sflag, size = 0x4, scoped, tag = 'scoped memory for tpu_custom_call.1']
    #allocation5 [shape = 'u8[4096]{0}', space=vmem, size = 0x1000, scoped, tag = 'input window, operand 1, single buffered']
    #allocation6 [shape = 's32[1]{0}', space=sflag, size = 0x4, scoped, tag = 'scoped memory for tpu_custom_call.1']
    #allocation7 [shape = 'u8[512]{0}', space=vmem, size = 0x400, scoped, tag = 'output window, operand 0, single buffered']
    %7 = vsyncpa [#allocation3], 0
    %8 = vsyncpa [#allocation6], 0
    %9 = vsyncpa [#allocation4], 0
    // Predicated region
    $region2: #{tpu_custom_call.1} parent=1 // pred_check
      _
    $region3: #{tpu_custom_call.1} parent=1 // pred_check_branch
      %11 = sbr.rel (0) target = $region5
    $region4: #{tpu_custom_call.1} parent=1 // pred_region
      %s13 = ssub.s32 128, 128
      %14 = vsyncadd [#allocation3], %s13
      %s16 = sshll.u32 [#allocation2], 4
      %s17 = int_to_ptr.vmem [resolvable:$true] %s16
      %19 = dma.hbm_to_vmem [thread:$0]  %s0, 128, %s17, [#allocation3]
    $region5: #{tpu_custom_call.1} parent=1 // pred_fallthru
      _
    // Predicated region
    $region6: #{tpu_custom_call.1} parent=1 // pred_check
      _
    $region7: #{tpu_custom_call.1} parent=1 // pred_check_branch
      %21 = sbr.rel (0) target = $region9
    $region8: #{tpu_custom_call.1} parent=1 // pred_region
      %s23 = ssub.s32 128, 128
      %24 = vsyncadd [#allocation6], %s23
      %s26 = sshll.u32 [#allocation5], 4
      %s27 = int_to_ptr.vmem [resolvable:$true] %s26
      %29 = dma.hbm_to_vmem [thread:$0]  %s1, 128, %s27, [#allocation6]
    $region9: #{tpu_custom_call.1} parent=1 // pred_fallthru
      _
    // Predicated region
    $region10: #{tpu_custom_call.1} parent=1 // pred_check
      _
    $region11: #{tpu_custom_call.1} parent=1 // pred_check_branch
      %31 = sbr.rel (0) target = $region13
    $region12: #{tpu_custom_call.1} parent=1 // pred_region
      %32 = dma.done [#allocation3], 128
    $region13: #{tpu_custom_call.1} parent=1 // pred_fallthru
      _
    // Predicated region
    $region14: #{tpu_custom_call.1} parent=1 // pred_check
      _
    $region15: #{tpu_custom_call.1} parent=1 // pred_check_branch
      %34 = sbr.rel (0) target = $region17
    $region16: #{tpu_custom_call.1} parent=1 // pred_region
      %35 = dma.done [#allocation6], 128
    $region17: #{tpu_custom_call.1} parent=1 // pred_fallthru
      _
    %v36 = vld [vmem:[#allocation2] sm:$0xff]
    %37 = vxpose.xlu0.b32.start [1/16] %v36, 128
    %38 = vxpose.xlu0.b32.cont [2/16] 0, 128
    %39 = vxpose.xlu0.b32.cont [3/16] 0, 128
    %40 = vxpose.xlu0.b32.cont [4/16] 0, 128
    %41 = vxpose.xlu0.b32.cont [5/16] 0, 128
    %42 = vxpose.xlu0.b32.cont [6/16] 0, 128
    %43 = vxpose.xlu0.b32.cont [7/16] 0, 128
    %44 = vxpose.xlu0.b32.cont [8/16] 0, 128
    %45 = vxpose.xlu0.b32.cont [9/16] 0, 128
    %46 = vxpose.xlu0.b32.cont [10/16] 0, 128
    %47 = vxpose.xlu0.b32.cont [11/16] 0, 128
    %48 = vxpose.xlu0.b32.cont [12/16] 0, 128
    %49 = vxpose.xlu0.b32.cont [13/16] 0, 128
    %50 = vxpose.xlu0.b32.cont [14/16] 0, 128
    %51 = vxpose.xlu0.b32.cont [15/16] 0, 128
    %52 = vxpose.xlu0.b32.end [16/16] 0, 128
    %v53 = vpop.trf.xlu0
    %v54 = vpop.trf.xlu0
    %v55 = vpop.trf.xlu0
    %v56 = vpop.trf.xlu0
    %v57 = vpop.trf.xlu0
    %v58 = vpop.trf.xlu0
    %v59 = vpop.trf.xlu0
    %v60 = vpop.trf.xlu0
    %v61 = vpop.trf.xlu0
    %v62 = vpop.trf.xlu0
    %v63 = vpop.trf.xlu0
    %v64 = vpop.trf.xlu0
    %v65 = vpop.trf.xlu0
    %v66 = vpop.trf.xlu0
    %v67 = vpop.trf.xlu0
    %v68 = vpop.trf.xlu0
    %69 = vset.pattern.permute.xlu0 0
    %70 = vperm.xlu0 %69, %v53
    %v71 = vpop.permute.xlu0 %70
    %72 = vset.pattern.permute.xlu0 0
    %73 = vperm.xlu0 %72, %v54
    %v74 = vpop.permute.xlu0 %73
    %75 = vset.pattern.permute.xlu0 0
    %76 = vperm.xlu0 %75, %v55
    %v77 = vpop.permute.xlu0 %76
    %78 = vset.pattern.permute.xlu0 0
    %79 = vperm.xlu0 %78, %v56
    %v80 = vpop.permute.xlu0 %79
    %81 = vset.pattern.permute.xlu0 0
    %82 = vperm.xlu0 %81, %v57
    %v83 = vpop.permute.xlu0 %82
    %84 = vset.pattern.permute.xlu0 0
    %85 = vperm.xlu0 %84, %v58
    %v86 = vpop.permute.xlu0 %85
    %87 = vset.pattern.permute.xlu0 0
    %88 = vperm.xlu0 %87, %v59
    %v89 = vpop.permute.xlu0 %88
    %90 = vset.pattern.permute.xlu0 0
    %91 = vperm.xlu0 %90, %v60
    %v92 = vpop.permute.xlu0 %91
    %93 = vset.pattern.permute.xlu0 0
    %94 = vperm.xlu0 %93, %v61
    %v95 = vpop.permute.xlu0 %94
    %96 = vset.pattern.permute.xlu0 0
    %97 = vperm.xlu0 %96, %v62
    %v98 = vpop.permute.xlu0 %97
    %99 = vset.pattern.permute.xlu0 0
    %100 = vperm.xlu0 %99, %v63
    %v101 = vpop.permute.xlu0 %100
    %102 = vset.pattern.permute.xlu0 0
    %103 = vperm.xlu0 %102, %v64
    %v104 = vpop.permute.xlu0 %103
    %105 = vset.pattern.permute.xlu0 0
    %106 = vperm.xlu0 %105, %v65
    %v107 = vpop.permute.xlu0 %106
    %108 = vset.pattern.permute.xlu0 0
    %109 = vperm.xlu0 %108, %v66
    %v110 = vpop.permute.xlu0 %109
    %111 = vset.pattern.permute.xlu0 0
    %112 = vperm.xlu0 %111, %v67
    %v113 = vpop.permute.xlu0 %112
    %114 = vset.pattern.permute.xlu0 0
    %115 = vperm.xlu0 %114, %v68
    %v116 = vpop.permute.xlu0 %115
    %117 = vset.pattern.permute.xlu0 1
    %118 = vperm.xlu0 %117, %v53
    %v119 = vpop.permute.xlu0 %118
    %120 = vset.pattern.permute.xlu0 1
    %121 = vperm.xlu0 %120, %v54
    %v122 = vpop.permute.xlu0 %121
    %123 = vset.pattern.permute.xlu0 1
    %124 = vperm.xlu0 %123, %v55
    %v125 = vpop.permute.xlu0 %124
    %126 = vset.pattern.permute.xlu0 1
    %127 = vperm.xlu0 %126, %v56
    %v128 = vpop.permute.xlu0 %127
    %129 = vset.pattern.permute.xlu0 1
    %130 = vperm.xlu0 %129, %v57
    %v131 = vpop.permute.xlu0 %130
    %132 = vset.pattern.permute.xlu0 1
    %133 = vperm.xlu0 %132, %v58
    %v134 = vpop.permute.xlu0 %133
    %135 = vset.pattern.permute.xlu0 1
    %136 = vperm.xlu0 %135, %v59
    %v137 = vpop.permute.xlu0 %136
    %138 = vset.pattern.permute.xlu0 1
    %139 = vperm.xlu0 %138, %v60
    %v140 = vpop.permute.xlu0 %139
    %141 = vset.pattern.permute.xlu0 1
    %142 = vperm.xlu0 %141, %v61
    %v143 = vpop.permute.xlu0 %142
    %144 = vset.pattern.permute.xlu0 1
    %145 = vperm.xlu0 %144, %v62
    %v146 = vpop.permute.xlu0 %145
    %147 = vset.pattern.permute.xlu0 1
    %148 = vperm.xlu0 %147, %v63
    %v149 = vpop.permute.xlu0 %148
    %150 = vset.pattern.permute.xlu0 1
    %151 = vperm.xlu0 %150, %v64
    %v152 = vpop.permute.xlu0 %151
    %153 = vset.pattern.permute.xlu0 1
    %154 = vperm.xlu0 %153, %v65
    %v155 = vpop.permute.xlu0 %154
    %156 = vset.pattern.permute.xlu0 1
    %157 = vperm.xlu0 %156, %v66
    %v158 = vpop.permute.xlu0 %157
    %159 = vset.pattern.permute.xlu0 1
    %160 = vperm.xlu0 %159, %v67
    %v161 = vpop.permute.xlu0 %160
    %162 = vset.pattern.permute.xlu0 1
    %163 = vperm.xlu0 %162, %v68
    %v164 = vpop.permute.xlu0 %163
    %165 = vset.pattern.permute.xlu0 2
    %166 = vperm.xlu0 %165, %v53
    %v167 = vpop.permute.xlu0 %166
    %168 = vset.pattern.permute.xlu0 2
    %169 = vperm.xlu0 %168, %v54
    %v170 = vpop.permute.xlu0 %169
    %171 = vset.pattern.permute.xlu0 2
    %172 = vperm.xlu0 %171, %v55
    %v173 = vpop.permute.xlu0 %172
    %174 = vset.pattern.permute.xlu0 2
    %175 = vperm.xlu0 %174, %v56
    %v176 = vpop.permute.xlu0 %175
    %177 = vset.pattern.permute.xlu0 2
    %178 = vperm.xlu0 %177, %v57
    %v179 = vpop.permute.xlu0 %178
    %180 = vset.pattern.permute.xlu0 2
    %181 = vperm.xlu0 %180, %v58
    %v182 = vpop.permute.xlu0 %181
    %183 = vset.pattern.permute.xlu0 2
    %184 = vperm.xlu0 %183, %v59
    %v185 = vpop.permute.xlu0 %184
    %186 = vset.pattern.permute.xlu0 2
    %187 = vperm.xlu0 %186, %v60
    %v188 = vpop.permute.xlu0 %187
    %189 = vset.pattern.permute.xlu0 2
    %190 = vperm.xlu0 %189, %v61
    %v191 = vpop.permute.xlu0 %190
    %192 = vset.pattern.permute.xlu0 2
    %193 = vperm.xlu0 %192, %v62
    %v194 = vpop.permute.xlu0 %193
    %195 = vset.pattern.permute.xlu0 2
    %196 = vperm.xlu0 %195, %v63
    %v197 = vpop.permute.xlu0 %196
    %198 = vset.pattern.permute.xlu0 2
    %199 = vperm.xlu0 %198, %v64
    %v200 = vpop.permute.xlu0 %199
    %201 = vset.pattern.permute.xlu0 2
    %202 = vperm.xlu0 %201, %v65
    %v203 = vpop.permute.xlu0 %202
    %204 = vset.pattern.permute.xlu0 2
    %205 = vperm.xlu0 %204, %v66
    %v206 = vpop.permute.xlu0 %205
    %207 = vset.pattern.permute.xlu0 2
    %208 = vperm.xlu0 %207, %v67
    %v209 = vpop.permute.xlu0 %208
    %210 = vset.pattern.permute.xlu0 2
    %211 = vperm.xlu0 %210, %v68
    %v212 = vpop.permute.xlu0 %211
    %213 = vset.pattern.permute.xlu0 3
    %214 = vperm.xlu0 %213, %v53
    %v215 = vpop.permute.xlu0 %214
    %216 = vset.pattern.permute.xlu0 3
    %217 = vperm.xlu0 %216, %v54
    %v218 = vpop.permute.xlu0 %217
    %219 = vset.pattern.permute.xlu0 3
    %220 = vperm.xlu0 %219, %v55
    %v221 = vpop.permute.xlu0 %220
    %222 = vset.pattern.permute.xlu0 3
    %223 = vperm.xlu0 %222, %v56
    %v224 = vpop.permute.xlu0 %223
    %225 = vset.pattern.permute.xlu0 3
    %226 = vperm.xlu0 %225, %v57
    %v227 = vpop.permute.xlu0 %226
    %228 = vset.pattern.permute.xlu0 3
    %229 = vperm.xlu0 %228, %v58
    %v230 = vpop.permute.xlu0 %229
    %231 = vset.pattern.permute.xlu0 3
    %232 = vperm.xlu0 %231, %v59
    %v233 = vpop.permute.xlu0 %232
    %234 = vset.pattern.permute.xlu0 3
    %235 = vperm.xlu0 %234, %v60
    %v236 = vpop.permute.xlu0 %235
    %237 = vset.pattern.permute.xlu0 3
    %238 = vperm.xlu0 %237, %v61
    %v239 = vpop.permute.xlu0 %238
    %240 = vset.pattern.permute.xlu0 3
    %241 = vperm.xlu0 %240, %v62
    %v242 = vpop.permute.xlu0 %241
    %243 = vset.pattern.permute.xlu0 3
    %244 = vperm.xlu0 %243, %v63
    %v245 = vpop.permute.xlu0 %244
    %246 = vset.pattern.permute.xlu0 3
    %247 = vperm.xlu0 %246, %v64
    %v248 = vpop.permute.xlu0 %247
    %249 = vset.pattern.permute.xlu0 3
    %250 = vperm.xlu0 %249, %v65
    %v251 = vpop.permute.xlu0 %250
    %252 = vset.pattern.permute.xlu0 3
    %253 = vperm.xlu0 %252, %v66
    %v254 = vpop.permute.xlu0 %253
    %255 = vset.pattern.permute.xlu0 3
    %256 = vperm.xlu0 %255, %v67
    %v257 = vpop.permute.xlu0 %256
    %258 = vset.pattern.permute.xlu0 3
    %259 = vperm.xlu0 %258, %v68
    %v260 = vpop.permute.xlu0 %259
    %261 = vset.pattern.permute.xlu0 4
    %262 = vperm.xlu0 %261, %v53
    %v263 = vpop.permute.xlu0 %262
    %264 = vset.pattern.permute.xlu0 4
    %265 = vperm.xlu0 %264, %v54
    %v266 = vpop.permute.xlu0 %265
    %267 = vset.pattern.permute.xlu0 4
    %268 = vperm.xlu0 %267, %v55
    %v269 = vpop.permute.xlu0 %268
    %270 = vset.pattern.permute.xlu0 4
    %271 = vperm.xlu0 %270, %v56
    %v272 = vpop.permute.xlu0 %271
    %273 = vset.pattern.permute.xlu0 4
    %274 = vperm.xlu0 %273, %v57
    %v275 = vpop.permute.xlu0 %274
    %276 = vset.pattern.permute.xlu0 4
    %277 = vperm.xlu0 %276, %v58
    %v278 = vpop.permute.xlu0 %277
    %279 = vset.pattern.permute.xlu0 4
    %280 = vperm.xlu0 %279, %v59
    %v281 = vpop.permute.xlu0 %280
    %282 = vset.pattern.permute.xlu0 4
    %283 = vperm.xlu0 %282, %v60
    %v284 = vpop.permute.xlu0 %283
    %285 = vset.pattern.permute.xlu0 4
    %286 = vperm.xlu0 %285, %v61
    %v287 = vpop.permute.xlu0 %286
    %288 = vset.pattern.permute.xlu0 4
    %289 = vperm.xlu0 %288, %v62
    %v290 = vpop.permute.xlu0 %289
    %291 = vset.pattern.permute.xlu0 4
    %292 = vperm.xlu0 %291, %v63
    %v293 = vpop.permute.xlu0 %292
    %294 = vset.pattern.permute.xlu0 4
    %295 = vperm.xlu0 %294, %v64
    %v296 = vpop.permute.xlu0 %295
    %297 = vset.pattern.permute.xlu0 4
    %298 = vperm.xlu0 %297, %v65
    %v299 = vpop.permute.xlu0 %298
    %300 = vset.pattern.permute.xlu0 4
    %301 = vperm.xlu0 %300, %v66
    %v302 = vpop.permute.xlu0 %301
    %303 = vset.pattern.permute.xlu0 4
    %304 = vperm.xlu0 %303, %v67
    %v305 = vpop.permute.xlu0 %304
    %306 = vset.pattern.permute.xlu0 4
    %307 = vperm.xlu0 %306, %v68
    %v308 = vpop.permute.xlu0 %307
    %309 = vset.pattern.permute.xlu0 5
    %310 = vperm.xlu0 %309, %v53
    %v311 = vpop.permute.xlu0 %310
    %312 = vset.pattern.permute.xlu0 5
    %313 = vperm.xlu0 %312, %v54
    %v314 = vpop.permute.xlu0 %313
    %315 = vset.pattern.permute.xlu0 5
    %316 = vperm.xlu0 %315, %v55
    %v317 = vpop.permute.xlu0 %316
    %318 = vset.pattern.permute.xlu0 5
    %319 = vperm.xlu0 %318, %v56
    %v320 = vpop.permute.xlu0 %319
    %321 = vset.pattern.permute.xlu0 5
    %322 = vperm.xlu0 %321, %v57
    %v323 = vpop.permute.xlu0 %322
    %324 = vset.pattern.permute.xlu0 5
    %325 = vperm.xlu0 %324, %v58
    %v326 = vpop.permute.xlu0 %325
    %327 = vset.pattern.permute.xlu0 5
    %328 = vperm.xlu0 %327, %v59
    %v329 = vpop.permute.xlu0 %328
    %330 = vset.pattern.permute.xlu0 5
    %331 = vperm.xlu0 %330, %v60
    %v332 = vpop.permute.xlu0 %331
    %333 = vset.pattern.permute.xlu0 5
    %334 = vperm.xlu0 %333, %v61
    %v335 = vpop.permute.xlu0 %334
    %336 = vset.pattern.permute.xlu0 5
    %337 = vperm.xlu0 %336, %v62
    %v338 = vpop.permute.xlu0 %337
    %339 = vset.pattern.permute.xlu0 5
    %340 = vperm.xlu0 %339, %v63
    %v341 = vpop.permute.xlu0 %340
    %342 = vset.pattern.permute.xlu0 5
    %343 = vperm.xlu0 %342, %v64
    %v344 = vpop.permute.xlu0 %343
    %345 = vset.pattern.permute.xlu0 5
    %346 = vperm.xlu0 %345, %v65
    %v347 = vpop.permute.xlu0 %346
    %348 = vset.pattern.permute.xlu0 5
    %349 = vperm.xlu0 %348, %v66
    %v350 = vpop.permute.xlu0 %349
    %351 = vset.pattern.permute.xlu0 5
    %352 = vperm.xlu0 %351, %v67
    %v353 = vpop.permute.xlu0 %352
    %354 = vset.pattern.permute.xlu0 5
    %355 = vperm.xlu0 %354, %v68
    %v356 = vpop.permute.xlu0 %355
    %357 = vset.pattern.permute.xlu0 6
    %358 = vperm.xlu0 %357, %v53
    %v359 = vpop.permute.xlu0 %358
    %360 = vset.pattern.permute.xlu0 6
    %361 = vperm.xlu0 %360, %v54
    %v362 = vpop.permute.xlu0 %361
    %363 = vset.pattern.permute.xlu0 6
    %364 = vperm.xlu0 %363, %v55
    %v365 = vpop.permute.xlu0 %364
    %366 = vset.pattern.permute.xlu0 6
    %367 = vperm.xlu0 %366, %v56
    %v368 = vpop.permute.xlu0 %367
    %369 = vset.pattern.permute.xlu0 6
    %370 = vperm.xlu0 %369, %v57
    %v371 = vpop.permute.xlu0 %370
    %372 = vset.pattern.permute.xlu0 6
    %373 = vperm.xlu0 %372, %v58
    %v374 = vpop.permute.xlu0 %373
    %375 = vset.pattern.permute.xlu0 6
    %376 = vperm.xlu0 %375, %v59
    %v377 = vpop.permute.xlu0 %376
    %378 = vset.pattern.permute.xlu0 6
    %379 = vperm.xlu0 %378, %v60
    %v380 = vpop.permute.xlu0 %379
    %381 = vset.pattern.permute.xlu0 6
    %382 = vperm.xlu0 %381, %v61
    %v383 = vpop.permute.xlu0 %382
    %384 = vset.pattern.permute.xlu0 6
    %385 = vperm.xlu0 %384, %v62
    %v386 = vpop.permute.xlu0 %385
    %387 = vset.pattern.permute.xlu0 6
    %388 = vperm.xlu0 %387, %v63
    %v389 = vpop.permute.xlu0 %388
    %390 = vset.pattern.permute.xlu0 6
    %391 = vperm.xlu0 %390, %v64
    %v392 = vpop.permute.xlu0 %391
    %393 = vset.pattern.permute.xlu0 6
    %394 = vperm.xlu0 %393, %v65
    %v395 = vpop.permute.xlu0 %394
    %396 = vset.pattern.permute.xlu0 6
    %397 = vperm.xlu0 %396, %v66
    %v398 = vpop.permute.xlu0 %397
    %399 = vset.pattern.permute.xlu0 6
    %400 = vperm.xlu0 %399, %v67
    %v401 = vpop.permute.xlu0 %400
    %402 = vset.pattern.permute.xlu0 6
    %403 = vperm.xlu0 %402, %v68
    %v404 = vpop.permute.xlu0 %403
    %405 = vset.pattern.permute.xlu0 7
    %406 = vperm.xlu0 %405, %v53
    %v407 = vpop.permute.xlu0 %406
    %408 = vset.pattern.permute.xlu0 7
    %409 = vperm.xlu0 %408, %v54
    %v410 = vpop.permute.xlu0 %409
    %411 = vset.pattern.permute.xlu0 7
    %412 = vperm.xlu0 %411, %v55
    %v413 = vpop.permute.xlu0 %412
    %414 = vset.pattern.permute.xlu0 7
    %415 = vperm.xlu0 %414, %v56
    %v416 = vpop.permute.xlu0 %415
    %417 = vset.pattern.permute.xlu0 7
    %418 = vperm.xlu0 %417, %v57
    %v419 = vpop.permute.xlu0 %418
    %420 = vset.pattern.permute.xlu0 7
    %421 = vperm.xlu0 %420, %v58
    %v422 = vpop.permute.xlu0 %421
    %423 = vset.pattern.permute.xlu0 7
    %424 = vperm.xlu0 %423, %v59
    %v425 = vpop.permute.xlu0 %424
    %426 = vset.pattern.permute.xlu0 7
    %427 = vperm.xlu0 %426, %v60
    %v428 = vpop.permute.xlu0 %427
    %429 = vset.pattern.permute.xlu0 7
    %430 = vperm.xlu0 %429, %v61
    %v431 = vpop.permute.xlu0 %430
    %432 = vset.pattern.permute.xlu0 7
    %433 = vperm.xlu0 %432, %v62
    %v434 = vpop.permute.xlu0 %433
    %435 = vset.pattern.permute.xlu0 7
    %436 = vperm.xlu0 %435, %v63
    %v437 = vpop.permute.xlu0 %436
    %438 = vset.pattern.permute.xlu0 7
    %439 = vperm.xlu0 %438, %v64
    %v440 = vpop.permute.xlu0 %439
    %441 = vset.pattern.permute.xlu0 7
    %442 = vperm.xlu0 %441, %v65
    %v443 = vpop.permute.xlu0 %442
    %444 = vset.pattern.permute.xlu0 7
    %445 = vperm.xlu0 %444, %v66
    %v446 = vpop.permute.xlu0 %445
    %447 = vset.pattern.permute.xlu0 7
    %448 = vperm.xlu0 %447, %v67
    %v449 = vpop.permute.xlu0 %448
    %450 = vset.pattern.permute.xlu0 7
    %451 = vperm.xlu0 %450, %v68
    %v452 = vpop.permute.xlu0 %451
    %vm453 = vcmask 130048
    %v454 = vsel %vm453, %v71, %v119
    %v455 = vsel %vm453, %v74, %v122
    %v456 = vsel %vm453, %v77, %v125
    %v457 = vsel %vm453, %v80, %v128
    %v458 = vsel %vm453, %v83, %v131
    %v459 = vsel %vm453, %v86, %v134
    %v460 = vsel %vm453, %v89, %v137
    %v461 = vsel %vm453, %v92, %v140
    %v462 = vsel %vm453, %v95, %v143
    %v463 = vsel %vm453, %v98, %v146
    %v464 = vsel %vm453, %v101, %v149
    %v465 = vsel %vm453, %v104, %v152
    %v466 = vsel %vm453, %v107, %v155
    %v467 = vsel %vm453, %v110, %v158
    %v468 = vsel %vm453, %v113, %v161
    %v469 = vsel %vm453, %v116, %v164
    %vm470 = vcmask 261120
    %v471 = vsel %vm470, %v454, %v167
    %v472 = vsel %vm470, %v455, %v170
    %v473 = vsel %vm470, %v456, %v173
    %v474 = vsel %vm470, %v457, %v176
    %v475 = vsel %vm470, %v458, %v179
    %v476 = vsel %vm470, %v459, %v182
    %v477 = vsel %vm470, %v460, %v185
    %v478 = vsel %vm470, %v461, %v188
    %v479 = vsel %vm470, %v462, %v191
    %v480 = vsel %vm470, %v463, %v194
    %v481 = vsel %vm470, %v464, %v197
    %v482 = vsel %vm470, %v465, %v200
    %v483 = vsel %vm470, %v466, %v203
    %v484 = vsel %vm470, %v467, %v206
    %v485 = vsel %vm470, %v468, %v209
    %v486 = vsel %vm470, %v469, %v212
    %vm487 = vcmask 392192
    %v488 = vsel %vm487, %v471, %v215
    %v489 = vsel %vm487, %v472, %v218
    %v490 = vsel %vm487, %v473, %v221
    %v491 = vsel %vm487, %v474, %v224
    %v492 = vsel %vm487, %v475, %v227
    %v493 = vsel %vm487, %v476, %v230
    %v494 = vsel %vm487, %v477, %v233
    %v495 = vsel %vm487, %v478, %v236
    %v496 = vsel %vm487, %v479, %v239
    %v497 = vsel %vm487, %v480, %v242
    %v498 = vsel %vm487, %v481, %v245
    %v499 = vsel %vm487, %v482, %v248
    %v500 = vsel %vm487, %v483, %v251
    %v501 = vsel %vm487, %v484, %v254
    %v502 = vsel %vm487, %v485, %v257
    %v503 = vsel %vm487, %v486, %v260
    %vm504 = vcmask 523264
    %v505 = vsel %vm504, %v488, %v263
    %v506 = vsel %vm504, %v489, %v266
    %v507 = vsel %vm504, %v490, %v269
    %v508 = vsel %vm504, %v491, %v272
    %v509 = vsel %vm504, %v492, %v275
    %v510 = vsel %vm504, %v493, %v278
    %v511 = vsel %vm504, %v494, %v281
    %v512 = vsel %vm504, %v495, %v284
    %v513 = vsel %vm504, %v496, %v287
    %v514 = vsel %vm504, %v497, %v290
    %v515 = vsel %vm504, %v498, %v293
    %v516 = vsel %vm504, %v499, %v296
    %v517 = vsel %vm504, %v500, %v299
    %v518 = vsel %vm504, %v501, %v302
    %v519 = vsel %vm504, %v502, %v305
    %v520 = vsel %vm504, %v503, %v308
    %vm521 = vcmask 654336
    %v522 = vsel %vm521, %v505, %v311
    %v523 = vsel %vm521, %v506, %v314
    %v524 = vsel %vm521, %v507, %v317
    %v525 = vsel %vm521, %v508, %v320
    %v526 = vsel %vm521, %v509, %v323
    %v527 = vsel %vm521, %v510, %v326
    %v528 = vsel %vm521, %v511, %v329
    %v529 = vsel %vm521, %v512, %v332
    %v530 = vsel %vm521, %v513, %v335
    %v531 = vsel %vm521, %v514, %v338
    %v532 = vsel %vm521, %v515, %v341
    %v533 = vsel %vm521, %v516, %v344
    %v534 = vsel %vm521, %v517, %v347
    %v535 = vsel %vm521, %v518, %v350
    %v536 = vsel %vm521, %v519, %v353
    %v537 = vsel %vm521, %v520, %v356
    %vm538 = vcmask 785408
    %v539 = vsel %vm538, %v522, %v359
    %v540 = vsel %vm538, %v523, %v362
    %v541 = vsel %vm538, %v524, %v365
    %v542 = vsel %vm538, %v525, %v368
    %v543 = vsel %vm538, %v526, %v371
    %v544 = vsel %vm538, %v527, %v374
    %v545 = vsel %vm538, %v528, %v377
    %v546 = vsel %vm538, %v529, %v380
    %v547 = vsel %vm538, %v530, %v383
    %v548 = vsel %vm538, %v531, %v386
    %v549 = vsel %vm538, %v532, %v389
    %v550 = vsel %vm538, %v533, %v392
    %v551 = vsel %vm538, %v534, %v395
    %v552 = vsel %vm538, %v535, %v398
    %v553 = vsel %vm538, %v536, %v401
    %v554 = vsel %vm538, %v537, %v404
    %vm555 = vcmask 916480
    %v556 = vsel %vm555, %v539, %v407
    %v557 = vsel %vm555, %v540, %v410
    %v558 = vsel %vm555, %v541, %v413
    %v559 = vsel %vm555, %v542, %v416
    %v560 = vsel %vm555, %v543, %v419
    %v561 = vsel %vm555, %v544, %v422
    %v562 = vsel %vm555, %v545, %v425
    %v563 = vsel %vm555, %v546, %v428
    %v564 = vsel %vm555, %v547, %v431
    %v565 = vsel %vm555, %v548, %v434
    %v566 = vsel %vm555, %v549, %v437
    %v567 = vsel %vm555, %v550, %v440
    %v568 = vsel %vm555, %v551, %v443
    %v569 = vsel %vm555, %v552, %v446
    %v570 = vsel %vm555, %v553, %v449
    %v571 = vsel %vm555, %v554, %v452
    %v572 = vlaneseq
    %v573 = vshrl.u32 %v572, 7
    %v574 = vadd.s32 %v573, 8
    %v575 = vadd.s32 %v573, 16
    %v576 = vadd.s32 %v573, 24
    %v577 = vadd.s32 %v573, 32
    %v578 = vadd.s32 %v573, 40
    %v579 = vadd.s32 %v573, 48
    %v580 = vadd.s32 %v573, 56
    %v581 = vadd.s32 %v573, 64
    %v582 = vadd.s32 %v573, 72
    %v583 = vadd.s32 %v573, 80
    %v584 = vadd.s32 %v573, 88
    %v585 = vadd.s32 %v573, 96
    %v586 = vadd.s32 %v573, 104
    %v587 = vadd.s32 %v573, 112
    %v588 = vadd.s32 %v573, 120
    %v589 = vld [vmem:[#allocation5] sm:$0x1]
    %v590 = vlaneseq
    %v591 = vshrl.u32 %v590, 7
    %v592 = vsub.s32 0, %v591
    %v593 = vrot.slane %v589, %v592
    %vm594 = vcmp.eq.s32.totalorder %v573, %v593
    %vm595 = vcmp.eq.s32.totalorder %v574, %v593
    %vm596 = vcmp.eq.s32.totalorder %v575, %v593
    %vm597 = vcmp.eq.s32.totalorder %v576, %v593
    %vm598 = vcmp.eq.s32.totalorder %v577, %v593
    %vm599 = vcmp.eq.s32.totalorder %v578, %v593
    %vm600 = vcmp.eq.s32.totalorder %v579, %v593
    %vm601 = vcmp.eq.s32.totalorder %v580, %v593
    %vm602 = vcmp.eq.s32.totalorder %v581, %v593
    %vm603 = vcmp.eq.s32.totalorder %v582, %v593
    %vm604 = vcmp.eq.s32.totalorder %v583, %v593
    %vm605 = vcmp.eq.s32.totalorder %v584, %v593
    %vm606 = vcmp.eq.s32.totalorder %v585, %v593
    %vm607 = vcmp.eq.s32.totalorder %v586, %v593
    %vm608 = vcmp.eq.s32.totalorder %v587, %v593
    %vm609 = vcmp.eq.s32.totalorder %v588, %v593
    %v610 = vsel %vm594, %v556, 0
    %v611 = vsel %vm595, %v557, 0
    %v612 = vsel %vm596, %v558, 0
    %v613 = vsel %vm597, %v559, 0
    %v614 = vsel %vm598, %v560, 0
    %v615 = vsel %vm599, %v561, 0
    %v616 = vsel %vm600, %v562, 0
    %v617 = vsel %vm601, %v563, 0
    %v618 = vsel %vm602, %v564, 0
    %v619 = vsel %vm603, %v565, 0
    %v620 = vsel %vm604, %v566, 0
    %v621 = vsel %vm605, %v567, 0
    %v622 = vsel %vm606, %v568, 0
    %v623 = vsel %vm607, %v569, 0
    %v624 = vsel %vm608, %v570, 0
    %v625 = vsel %vm609, %v571, 0
    %v626 = vadd.s32 %v610, %v614
    %v627 = vadd.s32 %v611, %v615
    %v628 = vadd.s32 %v612, %v616
    %v629 = vadd.s32 %v613, %v617
    %v630 = vadd.s32 %v626, %v618
    %v631 = vadd.s32 %v627, %v619
    %v632 = vadd.s32 %v628, %v620
    %v633 = vadd.s32 %v629, %v621
    %v634 = vadd.s32 %v630, %v622
    %v635 = vadd.s32 %v631, %v623
    %v636 = vadd.s32 %v632, %v624
    %v637 = vadd.s32 %v633, %v625
    %v638 = vadd.s32 %v634, %v635
    %v639 = vadd.s32 %v636, %v637
    %v640 = vadd.s32 %v638, %v639
    %v641 = vrot.slane %v640, 4
    %v642 = vadd.s32 %v640, %v641
    %v643 = vrot.slane %v642, 2
    %v644 = vadd.s32 %v642, %v643
    %v645 = vrot.slane %v644, 1
    %v646 = vadd.s32 %v644, %v645
    %v647 = vand.u32 %v646, 1073741823
    %v648 = vshra.s32 %v646, 30
    %v649 = vand.u32 %v648, 1
    loop: start=1, step=1, limit=8
    $region18: #{tpu_custom_call.1} parent=1 // loop_pre_header
      _
    $region19: #{tpu_custom_call.1} parent=1 // loop_header
      %s651 = sphi 1, %s655
      %p652 = scmp.ge.s32.totalorder %s651, 8
      %v656 = vphi %v647, %v721
      %v657 = vphi %v649, %v722
    $region20: #{tpu_custom_call.1} parent=1 // loop_header_branch
      %654 = sbr.rel (%p652) target = $region24
    $region21: #{tpu_custom_call.1} parent=1 // loop_body
      %s658 = scalar_lea.vmem [#allocation5], %s651
      %v659 = vld [vmem:[%s658] sm:$0x1]
      %v660 = vlaneseq
      %v661 = vshrl.u32 %v660, 7
      %v662 = vsub.s32 0, %v661
      %v663 = vrot.slane %v659, %v662
      %vm664 = vcmp.eq.s32.totalorder %v573, %v663
      %vm665 = vcmp.eq.s32.totalorder %v574, %v663
      %vm666 = vcmp.eq.s32.totalorder %v575, %v663
      %vm667 = vcmp.eq.s32.totalorder %v576, %v663
      %vm668 = vcmp.eq.s32.totalorder %v577, %v663
      %vm669 = vcmp.eq.s32.totalorder %v578, %v663
      %vm670 = vcmp.eq.s32.totalorder %v579, %v663
      %vm671 = vcmp.eq.s32.totalorder %v580, %v663
      %vm672 = vcmp.eq.s32.totalorder %v581, %v663
      %vm673 = vcmp.eq.s32.totalorder %v582, %v663
      %vm674 = vcmp.eq.s32.totalorder %v583, %v663
      %vm675 = vcmp.eq.s32.totalorder %v584, %v663
      %vm676 = vcmp.eq.s32.totalorder %v585, %v663
      %vm677 = vcmp.eq.s32.totalorder %v586, %v663
      %vm678 = vcmp.eq.s32.totalorder %v587, %v663
      %vm679 = vcmp.eq.s32.totalorder %v588, %v663
      %v680 = vsel %vm664, %v556, 0
      %v681 = vsel %vm665, %v557, 0
      %v682 = vsel %vm666, %v558, 0
      %v683 = vsel %vm667, %v559, 0
      %v684 = vsel %vm668, %v560, 0
      %v685 = vsel %vm669, %v561, 0
      %v686 = vsel %vm670, %v562, 0
      %v687 = vsel %vm671, %v563, 0
      %v688 = vsel %vm672, %v564, 0
      %v689 = vsel %vm673, %v565, 0
      %v690 = vsel %vm674, %v566, 0
      %v691 = vsel %vm675, %v567, 0
      %v692 = vsel %vm676, %v568, 0
      %v693 = vsel %vm677, %v569, 0
      %v694 = vsel %vm678, %v570, 0
      %v695 = vsel %vm679, %v571, 0
      %v696 = vadd.s32 %v680, %v684
      %v697 = vadd.s32 %v681, %v685
      %v698 = vadd.s32 %v682, %v686
      %v699 = vadd.s32 %v683, %v687
      %v700 = vadd.s32 %v696, %v688
      %v701 = vadd.s32 %v697, %v689
      %v702 = vadd.s32 %v698, %v690
      %v703 = vadd.s32 %v699, %v691
      %v704 = vadd.s32 %v700, %v692
      %v705 = vadd.s32 %v701, %v693
      %v706 = vadd.s32 %v702, %v694
      %v707 = vadd.s32 %v703, %v695
      %v708 = vadd.s32 %v704, %v705
      %v709 = vadd.s32 %v706, %v707
      %v710 = vadd.s32 %v708, %v709
      %v711 = vrot.slane %v710, 4
      %v712 = vadd.s32 %v710, %v711
      %v713 = vrot.slane %v712, 2
      %v714 = vadd.s32 %v712, %v713
      %v715 = vrot.slane %v714, 1
      %v716 = vadd.s32 %v714, %v715
      %v717 = vand.u32 %v716, 1073741823
      %v718 = vshra.s32 %v716, 30
      %v719 = vand.u32 %v718, 1
      %vm720 = vcmp.gt.s32.totalorder %v657, 0
      %v721 = vsel %vm720, %v717, %v656
      %v722 = vsel %vm720, %v719, %v657
    $region22: #{tpu_custom_call.1} parent=1 // loop_footer
      %s655 = sadd.s32 1, %s651
    $region23: #{tpu_custom_call.1} parent=1 // loop_footer_branch
      %650 = sbr.rel target = $region19
    $region24: #{tpu_custom_call.1} parent=1 // loop_exit
      _
    %723 = vst [vmem:[#allocation7] sm:$0x1] %v656
    // Predicated region
    $region25: #{tpu_custom_call.1} parent=1 // pred_check
      _
    $region26: #{tpu_custom_call.1} parent=1 // pred_check_branch
      %725 = sbr.rel (0) target = $region28
    $region27: #{tpu_custom_call.1} parent=1 // pred_region
      %s727 = ssub.s32 16, 16
      %728 = vsyncadd [#allocation4], %s727
      %s730 = sshll.u32 [#allocation7], 4
      %s731 = int_to_ptr.vmem [resolvable:$true] %s730
      %733 = dma.vmem_to_hbm [thread:$0]  %s731, 16, %s2, [#allocation4]
    $region28: #{tpu_custom_call.1} parent=1 // pred_fallthru
      _
    // Predicated region
    $region29: #{tpu_custom_call.1} parent=1 // pred_check
      _
    $region30: #{tpu_custom_call.1} parent=1 // pred_check_branch
      %735 = sbr.rel (0) target = $region32
    $region31: #{tpu_custom_call.1} parent=1 // pred_region
      %736 = dma.done [#allocation4], 16
    $region32: #{tpu_custom_call.1} parent=1 // pred_fallthru
      _
    %737 = vsyncpa [#allocation3], 1
    %738 = vsyncpa [#allocation6], 1
    %739 = vsyncpa [#allocation4], 1

</llo_original>
